<compile_context>
chip_gen: v7x
topology: tpu7x:2x2x1
jax: 0.10.0
libtpu: 0.0.40
codegen_flags: <defaults>
</compile_context>

<pallas_src>
import jax
import jax.numpy as jnp
from jax.experimental import pallas as pl
from jax.experimental.pallas import tpu as pltpu

EMBED_DIM = 768
NUM_CLASSES = 3

# Max rows of x per batch tile.  1024 x 768 f32 = 3 MiB per buffer
# (~6 MiB double-buffered), comfortably under the scoped-VMEM defaults on
# v5e (16 MiB), v6e (32 MiB) and v7x (32 MiB scoped / 64 MiB physical),
# while still being big enough to sit near the HBM roofline.
MAX_BATCH_TILE = 1024


def linear_kernel(x_ref, w_ref, b_ref, o_ref):
    # x_ref: (TB, E) VMEM tile, w_ref: (E, C), b_ref: (1, C), o_ref: (TB, C)
    acc = jnp.dot(x_ref[...], w_ref[...], preferred_element_type=jnp.float32)
    o_ref[...] = (acc + b_ref[...]).astype(o_ref.dtype)


def classification_model(x, w_t, b):
    """x: (B, EMBED_DIM) f32, w_t: (EMBED_DIM, C) f32, b: (C,) f32 -> (B, C) f32."""
    B, E = x.shape
    C = w_t.shape[1]

    # Batch tile: a multiple of 8 sublanes, capped for VMEM.  Small batches
    # get a single padded tile; large batches stream in MAX_BATCH_TILE chunks.
    tb = min(MAX_BATCH_TILE, ((B + 7) // 8) * 8)
    num_tiles = pl.cdiv(B, tb)
    b_pad = num_tiles * tb
    if b_pad != B:
        # Pad the batch so every tile is full (padded rows are sliced off below).
        x = jnp.pad(x, ((0, b_pad - B), (0, 0)))

    b2 = b.reshape(1, C)

    # Advisory cost hint so XLA schedules this custom call sensibly when it
    # sits inside a larger graph.  Dominated by the x read (mem-bound op).
    cost = pl.CostEstimate(
        flops=2 * b_pad * E * C,
        transcendentals=0,
        bytes_accessed=(b_pad * E + E * C + C + b_pad * C) * x.dtype.itemsize,
    )

    out = pl.pallas_call(
        linear_kernel,
        out_shape=jax.ShapeDtypeStruct((b_pad, C), x.dtype),
        grid=(num_tiles,),
        in_specs=[
            pl.BlockSpec((tb, E), lambda i: (i, 0)),  # streamed / pipelined x tiles
            pl.BlockSpec((E, C), lambda i: (0, 0)),   # weight resident in VMEM
            pl.BlockSpec((1, C), lambda i: (0, 0)),   # bias resident in VMEM
        ],
        # Note: C=3 output is deliberately left lane-narrow; output traffic is
        # 12 B/row vs 3072 B/row of x read, so padding it to 128 lanes would
        # only add HBM write traffic to a mem-bound kernel.
        out_specs=pl.BlockSpec((tb, C), lambda i: (i, 0)),
        compiler_params=pltpu.CompilerParams(
            # Batch tiles are independent -> shardable across v7x's 2 TCs;
            # a no-op (hence free) on single-TC v5e/v6e.
            dimension_semantics=("parallel",),
        ),
        cost_estimate=cost,
    )(x, w_t, b2)

    return out[:B]


if __name__ == "__main__":
    key = jax.random.PRNGKey(0)
    kx, kw, kb, kx2 = jax.random.split(key, 4)

    # Deterministic "parameters" (PyTorch nn.Linear(768, 3): W (3, 768), b (3,))
    bound = 1.0 / (EMBED_DIM ** 0.5)
    W = jax.random.uniform(kw, (NUM_CLASSES, EMBED_DIM), jnp.float32, -bound, bound)
    b = jax.random.uniform(kb, (NUM_CLASSES,), jnp.float32, -bound, bound)

    # Small batch (exercises the single padded-tile path).
    batch = 2
    x = jax.random.normal(kx, (batch, EMBED_DIM), jnp.float32)
    out = jax.block_until_ready(classification_model(x, W.T, b))
    ref = x @ W.T + b
    assert out.shape == (batch, NUM_CLASSES)
    assert jnp.allclose(out, ref, atol=1e-4, rtol=1e-4)

    # Larger batch (exercises multi-tile streaming + remainder padding).
    batch2 = MAX_BATCH_TILE + 8 + 3  # not a multiple of the tile size
    x2 = jax.random.normal(kx2, (batch2, EMBED_DIM), jnp.float32)
    out2 = jax.block_until_ready(classification_model(x2, W.T, b))
    ref2 = x2 @ W.T + b
    assert out2.shape == (batch2, NUM_CLASSES)
    assert jnp.allclose(out2, ref2, atol=1e-4, rtol=1e-4)

    print("KERNEL_OK")
</pallas_src>

<mosaic_0001>
module attributes {stable_mosaic.version = 11 : i64} {
  func.func @linear_kernel(%arg0: i32, %arg1: memref<8x768xf32, #tpu.memory_space<vmem>>, %arg2: memref<768x3xf32, #tpu.memory_space<vmem>>, %arg3: memref<1x3xf32, #tpu.memory_space<vmem>>, %arg4: memref<8x3xf32, #tpu.memory_space<vmem>>) attributes {dimension_semantics = [#tpu.dimension_semantics<parallel>], iteration_bounds = array<i64: 1>, scalar_prefetch = 0 : i64, scratch_operands = 0 : i64, tpu.core_type = #tpu.core_type<tc>, window_params = [{transform_indices = @transform_0, window_bounds = array<i64: 8, 768>}, {pipeline_mode = #tpu.pipeline_mode<synchronous>, transform_indices = @transform_1, window_bounds = array<i64: 768, 3>}, {pipeline_mode = #tpu.pipeline_mode<synchronous>, transform_indices = @transform_2, window_bounds = array<i64: 1, 3>}, {transform_indices = @transform_3, window_bounds = array<i64: 8, 3>}]} {
    %c0 = arith.constant 0 : index
    %c0_0 = arith.constant 0 : index
    %0 = vector.load %arg1[%c0, %c0_0] : memref<8x768xf32, #tpu.memory_space<vmem>>, vector<8x768xf32>
    %c0_1 = arith.constant 0 : index
    %c0_2 = arith.constant 0 : index
    %1 = vector.load %arg2[%c0_1, %c0_2] : memref<768x3xf32, #tpu.memory_space<vmem>>, vector<768x3xf32>
    %cst = arith.constant dense<0.000000e+00> : vector<8x3xf32>
    %2 = tpu.matmul %0, %1, %cst {dimension_numbers = #tpu.dot_dimension_numbers<[1], [0], [0], [1], [0, 0, 1, 1], [], []>} : vector<8x768xf32>, vector<768x3xf32>, vector<8x3xf32> -> vector<8x3xf32>
    %c0_3 = arith.constant 0 : index
    %c0_4 = arith.constant 0 : index
    %3 = vector.load %arg3[%c0_3, %c0_4] : memref<1x3xf32, #tpu.memory_space<vmem>>, vector<1x3xf32>
    %4 = vector.broadcast %3 : vector<1x3xf32> to vector<8x3xf32>
    %5 = arith.addf %2, %4 : vector<8x3xf32>
    %c0_5 = arith.constant 0 : index
    %c0_6 = arith.constant 0 : index
    %6 = vector.load %arg4[%c0_5, %c0_6] : memref<8x3xf32, #tpu.memory_space<vmem>>, vector<8x3xf32>
    tpu.vector_store %arg4[%c0_5, %c0_6], %5 {strides = array<i32>} : memref<8x3xf32, #tpu.memory_space<vmem>>, vector<8x3xf32>,
    return
  }
  func.func @transform_0(%arg0: i32) -> (i32, i32) {
    %c0_i32 = arith.constant 0 : i32
    %c0_i32_0 = arith.constant 0 : i32
    return %arg0, %c0_i32 : i32, i32
  }
  func.func @transform_1(%arg0: i32) -> (i32, i32) {
    %c0_i32 = arith.constant 0 : i32
    %c0_i32_0 = arith.constant 0 : i32
    %c0_i32_1 = arith.constant 0 : i32
    return %c0_i32, %c0_i32_0 : i32, i32
  }
  func.func @transform_2(%arg0: i32) -> (i32, i32) {
    %c0_i32 = arith.constant 0 : i32
    %c0_i32_0 = arith.constant 0 : i32
    %c0_i32_1 = arith.constant 0 : i32
    return %c0_i32, %c0_i32_0 : i32, i32
  }
  func.func @transform_3(%arg0: i32) -> (i32, i32) {
    %c0_i32 = arith.constant 0 : i32
    %c0_i32_0 = arith.constant 0 : i32
    return %arg0, %c0_i32 : i32, i32
  }
}

</mosaic_0001>

<llo_original>
// kernel: tpu_custom_call.1
$region0: #{tpu_custom_call.1}
  #allocation0 [shape = 'u32[]', space=smem, size = 0x4, offset = 0x4, fixed_abs, tag = 'smem constant byte address 0x4 - core index']
  #allocation1 [shape = 'u32[144,128]{1,0:T(1,128)}', space=vmem, size = 0x12000, scoped, tag = 'internal scratch']
  %s0 = inlined_call_operand.vmem [shape: f32[8,768], index: 0, kind: input, shape index: {}]
  %s1 = inlined_call_operand.vmem [shape: f32[768,3], index: 1, kind: input, shape index: {}]
  %s2 = inlined_call_operand.vmem [shape: f32[1,3], index: 2, kind: input, shape index: {}]
  %s3 = inlined_call_operand.vmem [shape: f32[8,3], index: 3, kind: output, shape index: {}]
  %s4 = sld [smem:[#allocation0]]
  $region22: #{tpu_custom_call.1} parent=0
    _
  %s6 = ssub.s32 1, %s4
  %s7 = scalar_select 0, %s6, %s4
  // Predicated region
  $region2: #{tpu_custom_call.1} parent=0 // pred_check
    _
  $region3: #{tpu_custom_call.1} parent=0 // pred_check_branch
    %9 = sbr.rel (0) target = $region5
  $region4: #{tpu_custom_call.1} parent=0 // pred_region
    _
  $region5: #{tpu_custom_call.1} parent=0 // pred_fallthru
    _
  // Predicated region
  $region6: #{tpu_custom_call.1} parent=0 // pred_check
    _
  $region7: #{tpu_custom_call.1} parent=0 // pred_check_branch
    %11 = sbr.rel (0) target = $region9
  $region8: #{tpu_custom_call.1} parent=0 // pred_region
    _
  $region9: #{tpu_custom_call.1} parent=0 // pred_fallthru
    _
  // Predicated region
  $region10: #{tpu_custom_call.1} parent=0 // pred_check
    _
  $region11: #{tpu_custom_call.1} parent=0 // pred_check_branch
    %13 = sbr.rel (0) target = $region13
  $region12: #{tpu_custom_call.1} parent=0 // pred_region
    _
  $region13: #{tpu_custom_call.1} parent=0 // pred_fallthru
    _
  %v14 = vld [vmem:[%s0] sm:$0xff]
  %v15 = vld [vmem:[%s0 + $0x8] sm:$0xff]
  %v16 = vld [vmem:[%s0 + $0x10] sm:$0xff]
  %v17 = vld [vmem:[%s0 + $0x18] sm:$0xff]
  %v18 = vld [vmem:[%s0 + $0x20] sm:$0xff]
  %v19 = vld [vmem:[%s0 + $0x28] sm:$0xff]
  %v20 = vld [vmem:[%s1] sm:$0xff]
  %v21 = vld [vmem:[%s1 + $0x8] sm:$0xff]
  %v22 = vld [vmem:[%s1 + $0x10] sm:$0xff]
  %v23 = vld [vmem:[%s1 + $0x18] sm:$0xff]
  %v24 = vld [vmem:[%s1 + $0x20] sm:$0xff]
  %v25 = vld [vmem:[%s1 + $0x28] sm:$0xff]
  %v26 = vld [vmem:[%s1 + $0x30] sm:$0xff]
  %v27 = vld [vmem:[%s1 + $0x38] sm:$0xff]
  %v28 = vld [vmem:[%s1 + $0x40] sm:$0xff]
  %v29 = vld [vmem:[%s1 + $0x48] sm:$0xff]
  %v30 = vld [vmem:[%s1 + $0x50] sm:$0xff]
  %v31 = vld [vmem:[%s1 + $0x58] sm:$0xff]
  %v32 = vld [vmem:[%s1 + $0x60] sm:$0xff]
  %v33 = vld [vmem:[%s1 + $0x68] sm:$0xff]
  %v34 = vld [vmem:[%s1 + $0x70] sm:$0xff]
  %v35 = vld [vmem:[%s1 + $0x78] sm:$0xff]
  %v36 = vld [vmem:[%s1 + $0x80] sm:$0xff]
  %v37 = vld [vmem:[%s1 + $0x88] sm:$0xff]
  %v38 = vld [vmem:[%s1 + $0x90] sm:$0xff]
  %v39 = vld [vmem:[%s1 + $0x98] sm:$0xff]
  %v40 = vld [vmem:[%s1 + $0xa0] sm:$0xff]
  %v41 = vld [vmem:[%s1 + $0xa8] sm:$0xff]
  %v42 = vld [vmem:[%s1 + $0xb0] sm:$0xff]
  %v43 = vld [vmem:[%s1 + $0xb8] sm:$0xff]
  %v44 = vld [vmem:[%s1 + $0xc0] sm:$0xff]
  %v45 = vld [vmem:[%s1 + $0xc8] sm:$0xff]
  %v46 = vld [vmem:[%s1 + $0xd0] sm:$0xff]
  %v47 = vld [vmem:[%s1 + $0xd8] sm:$0xff]
  %v48 = vld [vmem:[%s1 + $0xe0] sm:$0xff]
  %v49 = vld [vmem:[%s1 + $0xe8] sm:$0xff]
  %v50 = vld [vmem:[%s1 + $0xf0] sm:$0xff]
  %v51 = vld [vmem:[%s1 + $0xf8] sm:$0xff]
  %v52 = vld [vmem:[%s1 + $0x100] sm:$0xff]
  %v53 = vld [vmem:[%s1 + $0x108] sm:$0xff]
  %v54 = vld [vmem:[%s1 + $0x110] sm:$0xff]
  %v55 = vld [vmem:[%s1 + $0x118] sm:$0xff]
  %v56 = vld [vmem:[%s1 + $0x120] sm:$0xff]
  %v57 = vld [vmem:[%s1 + $0x128] sm:$0xff]
  %v58 = vld [vmem:[%s1 + $0x130] sm:$0xff]
  %v59 = vld [vmem:[%s1 + $0x138] sm:$0xff]
  %v60 = vld [vmem:[%s1 + $0x140] sm:$0xff]
  %v61 = vld [vmem:[%s1 + $0x148] sm:$0xff]
  %v62 = vld [vmem:[%s1 + $0x150] sm:$0xff]
  %v63 = vld [vmem:[%s1 + $0x158] sm:$0xff]
  %v64 = vld [vmem:[%s1 + $0x160] sm:$0xff]
  %v65 = vld [vmem:[%s1 + $0x168] sm:$0xff]
  %v66 = vld [vmem:[%s1 + $0x170] sm:$0xff]
  %v67 = vld [vmem:[%s1 + $0x178] sm:$0xff]
  %v68 = vld [vmem:[%s1 + $0x180] sm:$0xff]
  %v69 = vld [vmem:[%s1 + $0x188] sm:$0xff]
  %v70 = vld [vmem:[%s1 + $0x190] sm:$0xff]
  %v71 = vld [vmem:[%s1 + $0x198] sm:$0xff]
  %v72 = vld [vmem:[%s1 + $0x1a0] sm:$0xff]
  %v73 = vld [vmem:[%s1 + $0x1a8] sm:$0xff]
  %v74 = vld [vmem:[%s1 + $0x1b0] sm:$0xff]
  %v75 = vld [vmem:[%s1 + $0x1b8] sm:$0xff]
  %v76 = vld [vmem:[%s1 + $0x1c0] sm:$0xff]
  %v77 = vld [vmem:[%s1 + $0x1c8] sm:$0xff]
  %v78 = vld [vmem:[%s1 + $0x1d0] sm:$0xff]
  %v79 = vld [vmem:[%s1 + $0x1d8] sm:$0xff]
  %v80 = vld [vmem:[%s1 + $0x1e0] sm:$0xff]
  %v81 = vld [vmem:[%s1 + $0x1e8] sm:$0xff]
  %v82 = vld [vmem:[%s1 + $0x1f0] sm:$0xff]
  %v83 = vld [vmem:[%s1 + $0x1f8] sm:$0xff]
  %v84 = vld [vmem:[%s1 + $0x200] sm:$0xff]
  %v85 = vld [vmem:[%s1 + $0x208] sm:$0xff]
  %v86 = vld [vmem:[%s1 + $0x210] sm:$0xff]
  %v87 = vld [vmem:[%s1 + $0x218] sm:$0xff]
  %v88 = vld [vmem:[%s1 + $0x220] sm:$0xff]
  %v89 = vld [vmem:[%s1 + $0x228] sm:$0xff]
  %v90 = vld [vmem:[%s1 + $0x230] sm:$0xff]
  %v91 = vld [vmem:[%s1 + $0x238] sm:$0xff]
  %v92 = vld [vmem:[%s1 + $0x240] sm:$0xff]
  %v93 = vld [vmem:[%s1 + $0x248] sm:$0xff]
  %v94 = vld [vmem:[%s1 + $0x250] sm:$0xff]
  %v95 = vld [vmem:[%s1 + $0x258] sm:$0xff]
  %v96 = vld [vmem:[%s1 + $0x260] sm:$0xff]
  %v97 = vld [vmem:[%s1 + $0x268] sm:$0xff]
  %v98 = vld [vmem:[%s1 + $0x270] sm:$0xff]
  %v99 = vld [vmem:[%s1 + $0x278] sm:$0xff]
  %v100 = vld [vmem:[%s1 + $0x280] sm:$0xff]
  %v101 = vld [vmem:[%s1 + $0x288] sm:$0xff]
  %v102 = vld [vmem:[%s1 + $0x290] sm:$0xff]
  %v103 = vld [vmem:[%s1 + $0x298] sm:$0xff]
  %v104 = vld [vmem:[%s1 + $0x2a0] sm:$0xff]
  %v105 = vld [vmem:[%s1 + $0x2a8] sm:$0xff]
  %v106 = vld [vmem:[%s1 + $0x2b0] sm:$0xff]
  %v107 = vld [vmem:[%s1 + $0x2b8] sm:$0xff]
  %v108 = vld [vmem:[%s1 + $0x2c0] sm:$0xff]
  %v109 = vld [vmem:[%s1 + $0x2c8] sm:$0xff]
  %v110 = vld [vmem:[%s1 + $0x2d0] sm:$0xff]
  %v111 = vld [vmem:[%s1 + $0x2d8] sm:$0xff]
  %v112 = vld [vmem:[%s1 + $0x2e0] sm:$0xff]
  %v113 = vld [vmem:[%s1 + $0x2e8] sm:$0xff]
  %v114 = vld [vmem:[%s1 + $0x2f0] sm:$0xff]
  %v115 = vld [vmem:[%s1 + $0x2f8] sm:$0xff]
  %v116 = vld [vmem:[%s2] sm:$0x1]
  %v118 = vlaneseq
  %v119 = vshrl.u32 %v118, 7
  %v120 = vsub.s32 0, %v119
  %v121 = vrot.slane %v116, %v120
  %123 = vmatprep.subr.mxu0 0.0
  %124 = vmatpush1.msra.mxu0 %v20
  %125 = vmatprep.subr.mxu0 0.0
  %126 = vmatpush1.msra.mxu0 %v21
  %127 = vmatprep.subr.mxu0 0.0
  %128 = vmatpush1.msra.mxu0 %v22
  %129 = vmatprep.subr.mxu0 0.0
  %130 = vmatpush1.msra.mxu0 %v23
  %131 = vmatprep.subr.mxu0 0.0
  %132 = vmatpush1.msra.mxu0 %v24
  %133 = vmatprep.subr.mxu0 0.0
  %134 = vmatpush1.msra.mxu0 %v25
  %135 = vmatprep.subr.mxu0 0.0
  %136 = vmatpush1.msra.mxu0 %v26
  %137 = vmatprep.subr.mxu0 0.0
  %138 = vmatpush1.msra.mxu0 %v27
  %139 = vmatprep.subr.mxu0 0.0
  %140 = vmatpush1.msra.mxu0 %v28
  %141 = vmatprep.subr.mxu0 0.0
  %142 = vmatpush1.msra.mxu0 %v29
  %143 = vmatprep.subr.mxu0 0.0
  %144 = vmatpush1.msra.mxu0 %v30
  %145 = vmatprep.subr.mxu0 0.0
  %146 = vmatpush1.msra.mxu0 %v31
  %147 = vmatprep.subr.mxu0 0.0
  %148 = vmatpush1.msra.mxu0 %v32
  %149 = vmatprep.subr.mxu0 0.0
  %150 = vmatpush1.msra.mxu0 %v33
  %151 = vmatprep.subr.mxu0 0.0
  %152 = vmatpush1.msra.mxu0 %v34
  %153 = vmatprep.subr.mxu0 0.0
  %154 = vmatpush1.msra.mxu0 %v35
  %155 = vmatprep.subr.mxu0 0.0
  %156 = vmatpush1.msra.mxu0 %v36
  %157 = vmatprep.subr.mxu0 0.0
  %158 = vmatpush1.msra.mxu0 %v37
  %159 = vmatprep.subr.mxu0 0.0
  %160 = vmatpush1.msra.mxu0 %v38
  %161 = vmatprep.subr.mxu0 0.0
  %162 = vmatpush1.msra.mxu0 %v39
  %163 = vmatprep.subr.mxu0 0.0
  %164 = vmatpush1.msra.mxu0 %v40
  %165 = vmatprep.subr.mxu0 0.0
  %166 = vmatpush1.msra.mxu0 %v41
  %167 = vmatprep.subr.mxu0 0.0
  %168 = vmatpush1.msra.mxu0 %v42
  %169 = vmatprep.subr.mxu0 0.0
  %170 = vmatpush1.msra.mxu0 %v43
  %171 = vmatprep.subr.mxu0 0.0
  %172 = vmatpush1.msra.mxu0 %v44
  %173 = vmatprep.subr.mxu0 0.0
  %174 = vmatpush1.msra.mxu0 %v45
  %175 = vmatprep.subr.mxu0 0.0
  %176 = vmatpush1.msra.mxu0 %v46
  %177 = vmatprep.subr.mxu0 0.0
  %178 = vmatpush1.msra.mxu0 %v47
  %179 = vmatprep.subr.mxu0 0.0
  %180 = vmatpush1.msra.mxu0 %v48
  %181 = vmatprep.subr.mxu0 0.0
  %182 = vmatpush1.msra.mxu0 %v49
  %183 = vmatprep.subr.mxu0 0.0
  %184 = vmatpush1.msra.mxu0 %v50
  %185 = vmatprep.subr.mxu0 0.0
  %186 = vmatpush1.msra.mxu0 %v51
  %187 = vmatprep.mubr.f32.mxu0 %v15
  %188 = vmatmul.mubr.f32.gmra.mrb[0].mxu0 %v14
  %v189 = vpop.f32.mrb[0].mxu0
  %v190 = vadd.f32 %v121, %v189
  %v191 = vpop.f32.mrb[0].mxu0
  %192 = vdwg.mxu0
  %193 = vmatprep.subr.mxu0 0.0
  %194 = vmatpush1.msra.mxu0 %v52
  %195 = vmatprep.subr.mxu0 0.0
  %196 = vmatpush1.msra.mxu0 %v53
  %197 = vmatprep.subr.mxu0 0.0
  %198 = vmatpush1.msra.mxu0 %v54
  %199 = vmatprep.subr.mxu0 0.0
  %200 = vmatpush1.msra.mxu0 %v55
  %201 = vmatprep.subr.mxu0 0.0
  %202 = vmatpush1.msra.mxu0 %v56
  %203 = vmatprep.subr.mxu0 0.0
  %204 = vmatpush1.msra.mxu0 %v57
  %205 = vmatprep.subr.mxu0 0.0
  %206 = vmatpush1.msra.mxu0 %v58
  %207 = vmatprep.subr.mxu0 0.0
  %208 = vmatpush1.msra.mxu0 %v59
  %209 = vmatprep.subr.mxu0 0.0
  %210 = vmatpush1.msra.mxu0 %v60
  %211 = vmatprep.subr.mxu0 0.0
  %212 = vmatpush1.msra.mxu0 %v61
  %213 = vmatprep.subr.mxu0 0.0
  %214 = vmatpush1.msra.mxu0 %v62
  %215 = vmatprep.subr.mxu0 0.0
  %216 = vmatpush1.msra.mxu0 %v63
  %217 = vmatprep.subr.mxu0 0.0
  %218 = vmatpush1.msra.mxu0 %v64
  %219 = vmatprep.subr.mxu0 0.0
  %220 = vmatpush1.msra.mxu0 %v65
  %221 = vmatprep.subr.mxu0 0.0
  %222 = vmatpush1.msra.mxu0 %v66
  %223 = vmatprep.subr.mxu0 0.0
  %224 = vmatpush1.msra.mxu0 %v67
  %225 = vmatprep.subr.mxu0 0.0
  %226 = vmatpush1.msra.mxu0 %v68
  %227 = vmatprep.subr.mxu0 0.0
  %228 = vmatpush1.msra.mxu0 %v69
  %229 = vmatprep.subr.mxu0 0.0
  %230 = vmatpush1.msra.mxu0 %v70
  %231 = vmatprep.subr.mxu0 0.0
  %232 = vmatpush1.msra.mxu0 %v71
  %233 = vmatprep.subr.mxu0 0.0
  %234 = vmatpush1.msra.mxu0 %v72
  %235 = vmatprep.subr.mxu0 0.0
  %236 = vmatpush1.msra.mxu0 %v73
  %237 = vmatprep.subr.mxu0 0.0
  %238 = vmatpush1.msra.mxu0 %v74
  %239 = vmatprep.subr.mxu0 0.0
  %240 = vmatpush1.msra.mxu0 %v75
  %241 = vmatprep.subr.mxu0 0.0
  %242 = vmatpush1.msra.mxu0 %v76
  %243 = vmatprep.subr.mxu0 0.0
  %244 = vmatpush1.msra.mxu0 %v77
  %245 = vmatprep.subr.mxu0 0.0
  %246 = vmatpush1.msra.mxu0 %v78
  %247 = vmatprep.subr.mxu0 0.0
  %248 = vmatpush1.msra.mxu0 %v79
  %249 = vmatprep.subr.mxu0 0.0
  %250 = vmatpush1.msra.mxu0 %v80
  %251 = vmatprep.subr.mxu0 0.0
  %252 = vmatpush1.msra.mxu0 %v81
  %253 = vmatprep.subr.mxu0 0.0
  %254 = vmatpush1.msra.mxu0 %v82
  %255 = vmatprep.subr.mxu0 0.0
  %256 = vmatpush1.msra.mxu0 %v83
  %257 = vmatprep.mubr.f32.mxu0 %v17
  %258 = vmatmul.mubr.f32.gmra.mrb[0].mxu0 %v16
  %v259 = vpop.f32.mrb[0].mxu0
  %v260 = vadd.f32 %v190, %v259
  %v261 = vpop.f32.mrb[0].mxu0
  %262 = vdwg.mxu0
  %263 = vmatprep.subr.mxu0 0.0
  %264 = vmatpush1.msra.mxu0 %v84
  %265 = vmatprep.subr.mxu0 0.0
  %266 = vmatpush1.msra.mxu0 %v85
  %267 = vmatprep.subr.mxu0 0.0
  %268 = vmatpush1.msra.mxu0 %v86
  %269 = vmatprep.subr.mxu0 0.0
  %270 = vmatpush1.msra.mxu0 %v87
  %271 = vmatprep.subr.mxu0 0.0
  %272 = vmatpush1.msra.mxu0 %v88
  %273 = vmatprep.subr.mxu0 0.0
  %274 = vmatpush1.msra.mxu0 %v89
  %275 = vmatprep.subr.mxu0 0.0
  %276 = vmatpush1.msra.mxu0 %v90
  %277 = vmatprep.subr.mxu0 0.0
  %278 = vmatpush1.msra.mxu0 %v91
  %279 = vmatprep.subr.mxu0 0.0
  %280 = vmatpush1.msra.mxu0 %v92
  %281 = vmatprep.subr.mxu0 0.0
  %282 = vmatpush1.msra.mxu0 %v93
  %283 = vmatprep.subr.mxu0 0.0
  %284 = vmatpush1.msra.mxu0 %v94
  %285 = vmatprep.subr.mxu0 0.0
  %286 = vmatpush1.msra.mxu0 %v95
  %287 = vmatprep.subr.mxu0 0.0
  %288 = vmatpush1.msra.mxu0 %v96
  %289 = vmatprep.subr.mxu0 0.0
  %290 = vmatpush1.msra.mxu0 %v97
  %291 = vmatprep.subr.mxu0 0.0
  %292 = vmatpush1.msra.mxu0 %v98
  %293 = vmatprep.subr.mxu0 0.0
  %294 = vmatpush1.msra.mxu0 %v99
  %295 = vmatprep.subr.mxu0 0.0
  %296 = vmatpush1.msra.mxu0 %v100
  %297 = vmatprep.subr.mxu0 0.0
  %298 = vmatpush1.msra.mxu0 %v101
  %299 = vmatprep.subr.mxu0 0.0
  %300 = vmatpush1.msra.mxu0 %v102
  %301 = vmatprep.subr.mxu0 0.0
  %302 = vmatpush1.msra.mxu0 %v103
  %303 = vmatprep.subr.mxu0 0.0
  %304 = vmatpush1.msra.mxu0 %v104
  %305 = vmatprep.subr.mxu0 0.0
  %306 = vmatpush1.msra.mxu0 %v105
  %307 = vmatprep.subr.mxu0 0.0
  %308 = vmatpush1.msra.mxu0 %v106
  %309 = vmatprep.subr.mxu0 0.0
  %310 = vmatpush1.msra.mxu0 %v107
  %311 = vmatprep.subr.mxu0 0.0
  %312 = vmatpush1.msra.mxu0 %v108
  %313 = vmatprep.subr.mxu0 0.0
  %314 = vmatpush1.msra.mxu0 %v109
  %315 = vmatprep.subr.mxu0 0.0
  %316 = vmatpush1.msra.mxu0 %v110
  %317 = vmatprep.subr.mxu0 0.0
  %318 = vmatpush1.msra.mxu0 %v111
  %319 = vmatprep.subr.mxu0 0.0
  %320 = vmatpush1.msra.mxu0 %v112
  %321 = vmatprep.subr.mxu0 0.0
  %322 = vmatpush1.msra.mxu0 %v113
  %323 = vmatprep.subr.mxu0 0.0
  %324 = vmatpush1.msra.mxu0 %v114
  %325 = vmatprep.subr.mxu0 0.0
  %326 = vmatpush1.msra.mxu0 %v115
  %327 = vmatprep.mubr.f32.mxu0 %v19
  %328 = vmatmul.mubr.f32.gmra.mrb[0].mxu0 %v18
  %v329 = vpop.f32.mrb[0].mxu0
  %v330 = vadd.f32 %v260, %v329
  %v331 = vpop.f32.mrb[0].mxu0
  %332 = vdwg.mxu0
  %vm333 = vcmask 23552
  %334 = vst.msk [vmem:[%s3] sm:$0xff] %vm333, %v330
  // Predicated region
  $region14: #{tpu_custom_call.1} parent=0 // pred_check
    _
  $region15: #{tpu_custom_call.1} parent=0 // pred_check_branch
    %336 = sbr.rel (0) target = $region17
  $region16: #{tpu_custom_call.1} parent=0 // pred_region
    _
  $region17: #{tpu_custom_call.1} parent=0 // pred_fallthru
    _
  // Predicated region
  $region18: #{tpu_custom_call.1} parent=0 // pred_check
    _
  $region19: #{tpu_custom_call.1} parent=0 // pred_check_branch
    %338 = sbr.rel (0) target = $region21
  $region20: #{tpu_custom_call.1} parent=0 // pred_region
    _
  $region21: #{tpu_custom_call.1} parent=0 // pred_fallthru
    _

</llo_original>
